<compile_context>
chip_gen: v5e
topology: v5e:2x2
jax: 0.10.0
libtpu: 0.0.40
codegen_flags: <defaults>
</compile_context>

<pallas_src>
import jax
import jax.numpy as jnp
from jax import lax
from jax.experimental import pallas as pl
from jax.experimental.pallas import tpu as pltpu


def _compiler_params(semantics, block_bytes):
    # 2x for double-buffering + headroom; keep within v7x physical VMEM (64 MiB).
    needed = 2 * int(block_bytes) + (1 << 20)
    limit = int(min(max(needed, 16 << 20), 64 << 20))
    return pltpu.CompilerParams(dimension_semantics=semantics,
                                vmem_limit_bytes=limit)


# --------------------------------------------------------------------------- #
# Projection kernel (one pass over the token rows), fused additive terms:
#   head  = tanh(x @ Wh + bh)            (rows, P)  -> bf16 (MXU operand for biaffine)
#   mod   = tanh(x @ Wm + bm)            (rows, P)  -> bf16
#   hterm = head @ W_head                (rows, L)  f32
#   mside = W_mod^T contracted with mod  (L, rows)  f32, + output bias
# --------------------------------------------------------------------------- #
def _proj_kernel(x_ref, wh_ref, bh_ref, wm_ref, bm_ref, whead_ref, wmodT_ref, bias_ref,
                 head_ref, mod_ref, hterm_ref, mside_ref):
    x = x_ref[...]
    h = jnp.tanh(jnp.dot(x, wh_ref[...], preferred_element_type=jnp.float32) + bh_ref[...])
    m = jnp.tanh(jnp.dot(x, wm_ref[...], preferred_element_type=jnp.float32) + bm_ref[...])
    head_ref[...] = h.astype(head_ref.dtype)
    mod_ref[...] = m.astype(mod_ref.dtype)
    hterm_ref[...] = jnp.dot(h, whead_ref[...], preferred_element_type=jnp.float32)
    # mside[l, r] = sum_a mod[r, a] * W_mod[a, l] + bias[l]  (RHS-transposed matmul)
    mside = lax.dot_general(wmodT_ref[...], m, (((1,), (1,)), ((), ())),
                            preferred_element_type=jnp.float32)
    mside_ref[...] = mside + bias_ref[...]


def _projections(x, wh, bh, wm, bm, whead, wmodT, bias_col, *, tile_rows):
    n, d = x.shape
    p = wh.shape[1]
    nl = whead.shape[1]
    tr = tile_rows
    assert n % tr == 0 and (tr == n or tr % 128 == 0), \
        "projection row tile must be the full extent or a multiple of 128"
    const = lambda i: (0, 0)  # noqa: E731

    in_bytes = (tr * d + 2 * d * p + 2 * p + p * nl + nl * p + nl) * 4
    out_bytes = 2 * tr * p * 2 + tr * nl * 4 + nl * tr * 4
    cost = pl.CostEstimate(
        flops=int(4 * n * d * p + 4 * n * p * nl),
        transcendentals=int(2 * n * p),
        bytes_accessed=int((n * d + 2 * d * p + 2 * p + 2 * p * nl + nl) * 4
                           + 2 * n * p * 2 + 2 * n * nl * 4),
    )
    return pl.pallas_call(
        _proj_kernel,
        out_shape=(jax.ShapeDtypeStruct((n, p), jnp.bfloat16),   # head projection
                   jax.ShapeDtypeStruct((n, p), jnp.bfloat16),   # mod projection
                   jax.ShapeDtypeStruct((n, nl), jnp.float32),   # head additive term
                   jax.ShapeDtypeStruct((nl, n), jnp.float32)),  # mod additive term + bias
        grid_spec=pltpu.PrefetchScalarGridSpec(
            num_scalar_prefetch=0,
            grid=(n // tr,),
            in_specs=[
                pl.BlockSpec((tr, d), lambda i: (i, 0)),   # x row tile
                pl.BlockSpec((d, p), const),               # Wh
                pl.BlockSpec((1, p), const),               # bh
                pl.BlockSpec((d, p), const),               # Wm
                pl.BlockSpec((1, p), const),               # bm
                pl.BlockSpec((p, nl), const),              # W_head
                pl.BlockSpec((nl, p), const),              # W_mod^T
                pl.BlockSpec((nl, 1), const),              # output bias (column)
            ],
            out_specs=(pl.BlockSpec((tr, p), lambda i: (i, 0)),
                       pl.BlockSpec((tr, p), lambda i: (i, 0)),
                       pl.BlockSpec((tr, nl), lambda i: (i, 0)),
                       pl.BlockSpec((nl, tr), lambda i: (0, i))),
        ),
        compiler_params=_compiler_params(("parallel",), in_bytes + out_bytes),
        cost_estimate=cost,
    )(x, wh, bh, wm, bm, whead, wmodT, bias_col)


# --------------------------------------------------------------------------- #
# Biaffine kernel: one grid step = (TI head rows) x (all mods) x all L labels.
# --------------------------------------------------------------------------- #
def _biaffine_kernel(head_ref, mod_ref, uflat_ref, hterm_ref, mside_ref, o_ref):
    """head_ref : (TI, P)    bf16 tanh-projected head rows for this tile
    mod_ref   : (N, P)     bf16 tanh-projected mod rows (all of them)
    uflat_ref : (P, L*P)   bf16 interaction tensor, uflat[b, l*P+a] = U[l, a, b]
    hterm_ref : (TI, L)    f32  head_proj @ W_head
    mside_ref : (L, N)     f32  (mod_proj @ W_mod).T + output_bias
    o_ref     : (TI, L*N)  f32  lane-dense output slab, column index = l*N + m
    """
    head = head_ref[...]
    mod = mod_ref[...]
    hterm = hterm_ref[...]
    mside = mside_ref[...]
    p = head.shape[1]
    n_labels = hterm.shape[1]

    # One wide MXU matmul batching all labels:
    #   hu[h, l*P + a] = sum_b head[h, b] * U[l, a, b]
    hu = jnp.dot(head, uflat_ref[...], preferred_element_type=jnp.float32)  # (TI, L*P)

    pieces = []
    for lab in range(n_labels):  # static unroll; L is small
        t = hu[:, lab * p:(lab + 1) * p].astype(mod.dtype)                  # (TI, P) bf16
        # s[h, m] = sum_a t[h, a] * mod[m, a]   (RHS-transposed contraction)
        s = lax.dot_general(t, mod, (((1,), (1,)), ((), ())),
                            preferred_element_type=jnp.float32)             # (TI, N)
        pieces.append(s + hterm[:, lab:lab + 1] + mside[lab:lab + 1, :])
    # Single dense full-lane store of the whole (TI, L*N) slab.
    o_ref[...] = jnp.concatenate(pieces, axis=-1).astype(o_ref.dtype)


def biaffine_dependency(x, wh, bh, wm, bm, interaction_tensor, interaction_head,
                        interaction_mod=None, output_bias=None,
                        *, tile_heads=None, proj_tile_rows=None):
    """BiaffineDependencyBase.forward. Returns (N, N, L) indexed [head, mod, label]."""
    n, _ = x.shape
    nl, p, _ = interaction_tensor.shape

    ti = tile_heads if tile_heads is not None else n          # default: single grid step
    tr = proj_tile_rows if proj_tile_rows is not None else n
    assert n % ti == 0 and (ti == n or ti % 8 == 0)

    wmodT = (interaction_mod.T if interaction_mod is not None
             else jnp.zeros((nl, p), dtype=x.dtype))
    bias_col = (output_bias.reshape(nl, 1) if output_bias is not None
                else jnp.zeros((nl, 1), dtype=x.dtype))

    # Projections + additive terms computed once (single fused Pallas call).
    head_bf, mod_bf, hterm, mside = _projections(
        x, wh, bh, wm, bm, interaction_head, wmodT, bias_col, tile_rows=tr)

    # Uflat[b, l*P + a] = U[l, a, b]; bf16 MXU operand, grid-invariant block.
    uflat = jnp.transpose(interaction_tensor, (2, 0, 1)).reshape(p, nl * p)
    uflat = uflat.astype(jnp.bfloat16)

    in_bytes = ti * p * 2 + n * p * 2 + p * nl * p * 2 + ti * nl * 4 + nl * n * 4
    out_bytes = ti * nl * n * 4
    cost = pl.CostEstimate(
        flops=int(2 * n * p * nl * p + 2 * nl * n * n * p + 2 * nl * n * n),
        transcendentals=0,
        bytes_accessed=int(2 * n * p * 2 + p * nl * p * 2 + 2 * n * nl * 4 + nl * n * n * 4),
    )
    const = lambda i: (0, 0)  # noqa: E731
    out2d = pl.pallas_call(
        _biaffine_kernel,
        out_shape=jax.ShapeDtypeStruct((n, nl * n), jnp.float32),
        grid_spec=pltpu.PrefetchScalarGridSpec(
            num_scalar_prefetch=0,
            grid=(n // ti,),
            in_specs=[
                pl.BlockSpec((ti, p), lambda i: (i, 0)),   # head tile (bf16)
                pl.BlockSpec((n, p), const),               # all mods (bf16)
                pl.BlockSpec((p, nl * p), const),          # Uflat (grid-invariant)
                pl.BlockSpec((ti, nl), lambda i: (i, 0)),  # head additive term
                pl.BlockSpec((nl, n), const),              # mod additive term + bias
            ],
            out_specs=pl.BlockSpec((ti, nl * n), lambda i: (i, 0)),
        ),
        compiler_params=_compiler_params(("parallel",), in_bytes + out_bytes),
        cost_estimate=cost,
    )(head_bf, mod_bf, uflat, hterm, mside)

    # Layout plumbing only: (N, L*N) slab -> (N, N, L) indexed [head, mod, label].
    # TODO(synk): if the consumer accepts [head, label, mod] this transpose can be dropped.
    return jnp.transpose(out2d.reshape(n, nl, n), (0, 2, 1)).astype(x.dtype)


def _reference(x, wh, bh, wm, bm, U, w_head, w_mod, bias):
    """Pure-jnp f32 mirror of the PyTorch forward."""
    head = jnp.tanh(x @ wh + bh)
    mod = jnp.tanh(x @ wm + bm)
    vals = jnp.matmul(mod, jnp.matmul(U, head.T))   # (L, N, N) indexed [l, mod, head]
    vals = jnp.swapaxes(vals, 0, 2)                 # torch .transpose(0, -1) -> (N, N, L)
    vals = vals + (head @ w_head)[:, None, :]
    if w_mod is not None:
        vals = vals + (mod @ w_mod)[None, :, :]
    if bias is not None:
        vals = vals + bias.reshape(1, 1, -1)
    return vals


if __name__ == "__main__":
    # Small shapes implied by the module: n_words=16, input_dim=32, proj_dim=32, n_labels=8.
    N, D, P, L = 16, 32, 32, 8
    key = jax.random.PRNGKey(0)
    kx, k1, k2, k3, k4, k5 = jax.random.split(key, 6)

    x = jax.random.normal(kx, (N, D), dtype=jnp.float32)
    # head_projection / mod_projection MLP parameters.
    wh = 0.1 * jax.random.normal(k1, (D, P), dtype=jnp.float32)
    bh = jnp.zeros((1, P), dtype=jnp.float32)
    wm = 0.1 * jax.random.normal(k2, (D, P), dtype=jnp.float32)
    bm = jnp.zeros((1, P), dtype=jnp.float32)
    # Biaffine parameters (zero-initialised in the module; random here so the
    # numerical check is non-trivial).
    U = 0.1 * jax.random.normal(k3, (L, P, P), dtype=jnp.float32)    # hm_labeled_interaction_tensor
    w_head = 0.1 * jax.random.normal(k4, (P, L), dtype=jnp.float32)  # hm_labeled_interaction_head
    w_mod = 0.1 * jax.random.normal(k5, (P, L), dtype=jnp.float32)   # hm_labeled_interaction_mod
    bias = 0.1 * jnp.ones((1, 1, L), dtype=jnp.float32)              # output_bias

    # Defaults -> each pallas_call is a single grid step (tiny-N regime per perf review).
    run = jax.jit(biaffine_dependency)
    out = run(x, wh, bh, wm, bm, U, w_head, w_mod, bias)
    out = jax.block_until_ready(out)

    ref = _reference(x, wh, bh, wm, bm, U, w_head, w_mod, bias)
    assert out.shape == (N, N, L), out.shape
    err = float(jnp.max(jnp.abs(out - ref)))
    # Tolerance loosened vs the pure-f32 version: bilinear-path MXU operands are bf16
    # (f32 accumulation), per the performance review.
    assert jnp.allclose(out, ref, atol=5e-2, rtol=5e-2), err

    print("KERNEL_OK")
</pallas_src>

<mosaic_0001>
module attributes {stable_mosaic.version = 11 : i64} {
  func.func @_proj_kernel(%arg0: i32, %arg1: memref<16x32xf32, #tpu.memory_space<vmem>>, %arg2: memref<32x32xf32, #tpu.memory_space<vmem>>, %arg3: memref<1x32xf32, #tpu.memory_space<vmem>>, %arg4: memref<32x32xf32, #tpu.memory_space<vmem>>, %arg5: memref<1x32xf32, #tpu.memory_space<vmem>>, %arg6: memref<32x8xf32, #tpu.memory_space<vmem>>, %arg7: memref<8x32xf32, #tpu.memory_space<vmem>>, %arg8: memref<8x1xf32, #tpu.memory_space<vmem>>, %arg9: memref<16x32xbf16, #tpu.memory_space<vmem>>, %arg10: memref<16x32xbf16, #tpu.memory_space<vmem>>, %arg11: memref<16x8xf32, #tpu.memory_space<vmem>>, %arg12: memref<8x16xf32, #tpu.memory_space<vmem>>) attributes {dimension_semantics = [#tpu.dimension_semantics<parallel>], iteration_bounds = array<i64: 1>, scalar_prefetch = 0 : i64, scratch_operands = 0 : i64, tpu.core_type = #tpu.core_type<tc>, window_params = [{transform_indices = @transform_0, window_bounds = array<i64: 16, 32>}, {pipeline_mode = #tpu.pipeline_mode<synchronous>, transform_indices = @transform_1, window_bounds = array<i64: 32, 32>}, {pipeline_mode = #tpu.pipeline_mode<synchronous>, transform_indices = @transform_2, window_bounds = array<i64: 1, 32>}, {pipeline_mode = #tpu.pipeline_mode<synchronous>, transform_indices = @transform_3, window_bounds = array<i64: 32, 32>}, {pipeline_mode = #tpu.pipeline_mode<synchronous>, transform_indices = @transform_4, window_bounds = array<i64: 1, 32>}, {pipeline_mode = #tpu.pipeline_mode<synchronous>, transform_indices = @transform_5, window_bounds = array<i64: 32, 8>}, {pipeline_mode = #tpu.pipeline_mode<synchronous>, transform_indices = @transform_6, window_bounds = array<i64: 8, 32>}, {pipeline_mode = #tpu.pipeline_mode<synchronous>, transform_indices = @transform_7, window_bounds = array<i64: 8, 1>}, {transform_indices = @transform_8, window_bounds = array<i64: 16, 32>}, {transform_indices = @transform_9, window_bounds = array<i64: 16, 32>}, {transform_indices = @transform_10, window_bounds = array<i64: 16, 8>}, {transform_indices = @transform_11, window_bounds = array<i64: 8, 16>}]} {
    %c0 = arith.constant 0 : index
    %c0_0 = arith.constant 0 : index
    %0 = vector.load %arg1[%c0, %c0_0] : memref<16x32xf32, #tpu.memory_space<vmem>>, vector<16x32xf32>
    %c0_1 = arith.constant 0 : index
    %c0_2 = arith.constant 0 : index
    %1 = vector.load %arg2[%c0_1, %c0_2] : memref<32x32xf32, #tpu.memory_space<vmem>>, vector<32x32xf32>
    %cst = arith.constant dense<0.000000e+00> : vector<16x32xf32>
    %2 = tpu.matmul %0, %1, %cst {dimension_numbers = #tpu.dot_dimension_numbers<[1], [0], [0], [1], [0, 0, 1, 1], [], []>} : vector<16x32xf32>, vector<32x32xf32>, vector<16x32xf32> -> vector<16x32xf32>
    %c0_3 = arith.constant 0 : index
    %c0_4 = arith.constant 0 : index
    %3 = vector.load %arg3[%c0_3, %c0_4] : memref<1x32xf32, #tpu.memory_space<vmem>>, vector<1x32xf32>
    %4 = vector.broadcast %3 : vector<1x32xf32> to vector<16x32xf32>
    %5 = arith.addf %2, %4 : vector<16x32xf32>
    %6 = math.tanh %5 : vector<16x32xf32>
    %c0_5 = arith.constant 0 : index
    %c0_6 = arith.constant 0 : index
    %7 = vector.load %arg4[%c0_5, %c0_6] : memref<32x32xf32, #tpu.memory_space<vmem>>, vector<32x32xf32>
    %cst_7 = arith.constant dense<0.000000e+00> : vector<16x32xf32>
    %8 = tpu.matmul %0, %7, %cst_7 {dimension_numbers = #tpu.dot_dimension_numbers<[1], [0], [0], [1], [0, 0, 1, 1], [], []>} : vector<16x32xf32>, vector<32x32xf32>, vector<16x32xf32> -> vector<16x32xf32>
    %c0_8 = arith.constant 0 : index
    %c0_9 = arith.constant 0 : index
    %9 = vector.load %arg5[%c0_8, %c0_9] : memref<1x32xf32, #tpu.memory_space<vmem>>, vector<1x32xf32>
    %10 = vector.broadcast %9 : vector<1x32xf32> to vector<16x32xf32>
    %11 = arith.addf %8, %10 : vector<16x32xf32>
    %12 = math.tanh %11 : vector<16x32xf32>
    %13 = arith.truncf %6 : vector<16x32xf32> to vector<16x32xbf16>
    %c0_10 = arith.constant 0 : index
    %c0_11 = arith.constant 0 : index
    %14 = vector.load %arg9[%c0_10, %c0_11] : memref<16x32xbf16, #tpu.memory_space<vmem>>, vector<16x32xbf16>
    tpu.vector_store %arg9[%c0_10, %c0_11], %13 {strides = array<i32>} : memref<16x32xbf16, #tpu.memory_space<vmem>>, vector<16x32xbf16>,
    %15 = arith.truncf %12 : vector<16x32xf32> to vector<16x32xbf16>
    %c0_12 = arith.constant 0 : index
    %c0_13 = arith.constant 0 : index
    %16 = vector.load %arg10[%c0_12, %c0_13] : memref<16x32xbf16, #tpu.memory_space<vmem>>, vector<16x32xbf16>
    tpu.vector_store %arg10[%c0_12, %c0_13], %15 {strides = array<i32>} : memref<16x32xbf16, #tpu.memory_space<vmem>>, vector<16x32xbf16>,
    %c0_14 = arith.constant 0 : index
    %c0_15 = arith.constant 0 : index
    %17 = vector.load %arg6[%c0_14, %c0_15] : memref<32x8xf32, #tpu.memory_space<vmem>>, vector<32x8xf32>
    %cst_16 = arith.constant dense<0.000000e+00> : vector<16x8xf32>
    %18 = tpu.matmul %6, %17, %cst_16 {dimension_numbers = #tpu.dot_dimension_numbers<[1], [0], [0], [1], [0, 0, 1, 1], [], []>} : vector<16x32xf32>, vector<32x8xf32>, vector<16x8xf32> -> vector<16x8xf32>
    %c0_17 = arith.constant 0 : index
    %c0_18 = arith.constant 0 : index
    %19 = vector.load %arg11[%c0_17, %c0_18] : memref<16x8xf32, #tpu.memory_space<vmem>>, vector<16x8xf32>
    tpu.vector_store %arg11[%c0_17, %c0_18], %18 {strides = array<i32>} : memref<16x8xf32, #tpu.memory_space<vmem>>, vector<16x8xf32>,
    %c0_19 = arith.constant 0 : index
    %c0_20 = arith.constant 0 : index
    %20 = vector.load %arg7[%c0_19, %c0_20] : memref<8x32xf32, #tpu.memory_space<vmem>>, vector<8x32xf32>
    %cst_21 = arith.constant dense<0.000000e+00> : vector<8x16xf32>
    %21 = tpu.matmul %20, %12, %cst_21 {dimension_numbers = #tpu.dot_dimension_numbers<[1], [1], [0], [0], [0, 0, 1, 0], [], []>} : vector<8x32xf32>, vector<16x32xf32>, vector<8x16xf32> -> vector<8x16xf32>
    %c0_22 = arith.constant 0 : index
    %c0_23 = arith.constant 0 : index
    %22 = vector.load %arg8[%c0_22, %c0_23] : memref<8x1xf32, #tpu.memory_space<vmem>>, vector<8x1xf32>
    %23 = vector.broadcast %22 : vector<8x1xf32> to vector<8x16xf32>
    %24 = arith.addf %21, %23 : vector<8x16xf32>
    %c0_24 = arith.constant 0 : index
    %c0_25 = arith.constant 0 : index
    %25 = vector.load %arg12[%c0_24, %c0_25] : memref<8x16xf32, #tpu.memory_space<vmem>>, vector<8x16xf32>
    tpu.vector_store %arg12[%c0_24, %c0_25], %24 {strides = array<i32>} : memref<8x16xf32, #tpu.memory_space<vmem>>, vector<8x16xf32>,
    return
  }
  func.func @transform_0(%arg0: i32) -> (i32, i32) {
    %c0_i32 = arith.constant 0 : i32
    %c0_i32_0 = arith.constant 0 : i32
    return %arg0, %c0_i32 : i32, i32
  }
  func.func @transform_1(%arg0: i32) -> (i32, i32) {
    %c0_i32 = arith.constant 0 : i32
    %c0_i32_0 = arith.constant 0 : i32
    %c0_i32_1 = arith.constant 0 : i32
    return %c0_i32, %c0_i32_0 : i32, i32
  }
  func.func @transform_2(%arg0: i32) -> (i32, i32) {
    %c0_i32 = arith.constant 0 : i32
    %c0_i32_0 = arith.constant 0 : i32
    %c0_i32_1 = arith.constant 0 : i32
    return %c0_i32, %c0_i32_0 : i32, i32
  }
  func.func @transform_3(%arg0: i32) -> (i32, i32) {
    %c0_i32 = arith.constant 0 : i32
    %c0_i32_0 = arith.constant 0 : i32
    %c0_i32_1 = arith.constant 0 : i32
    return %c0_i32, %c0_i32_0 : i32, i32
  }
  func.func @transform_4(%arg0: i32) -> (i32, i32) {
    %c0_i32 = arith.constant 0 : i32
    %c0_i32_0 = arith.constant 0 : i32
    %c0_i32_1 = arith.constant 0 : i32
    return %c0_i32, %c0_i32_0 : i32, i32
  }
  func.func @transform_5(%arg0: i32) -> (i32, i32) {
    %c0_i32 = arith.constant 0 : i32
    %c0_i32_0 = arith.constant 0 : i32
    %c0_i32_1 = arith.constant 0 : i32
    return %c0_i32, %c0_i32_0 : i32, i32
  }
  func.func @transform_6(%arg0: i32) -> (i32, i32) {
    %c0_i32 = arith.constant 0 : i32
    %c0_i32_0 = arith.constant 0 : i32
    %c0_i32_1 = arith.constant 0 : i32
    return %c0_i32, %c0_i32_0 : i32, i32
  }
  func.func @transform_7(%arg0: i32) -> (i32, i32) {
    %c0_i32 = arith.constant 0 : i32
    %c0_i32_0 = arith.constant 0 : i32
    %c0_i32_1 = arith.constant 0 : i32
    return %c0_i32, %c0_i32_0 : i32, i32
  }
  func.func @transform_8(%arg0: i32) -> (i32, i32) {
    %c0_i32 = arith.constant 0 : i32
    %c0_i32_0 = arith.constant 0 : i32
    return %arg0, %c0_i32 : i32, i32
  }
  func.func @transform_9(%arg0: i32) -> (i32, i32) {
    %c0_i32 = arith.constant 0 : i32
    %c0_i32_0 = arith.constant 0 : i32
    return %arg0, %c0_i32 : i32, i32
  }
  func.func @transform_10(%arg0: i32) -> (i32, i32) {
    %c0_i32 = arith.constant 0 : i32
    %c0_i32_0 = arith.constant 0 : i32
    return %arg0, %c0_i32 : i32, i32
  }
  func.func @transform_11(%arg0: i32) -> (i32, i32) {
    %c0_i32 = arith.constant 0 : i32
    %c0_i32_0 = arith.constant 0 : i32
    return %c0_i32, %arg0 : i32, i32
  }
}

module attributes {stable_mosaic.version = 11 : i64} {
  func.func @_biaffine_kernel(%arg0: i32, %arg1: memref<16x32xbf16, #tpu.memory_space<vmem>>, %arg2: memref<16x32xbf16, #tpu.memory_space<vmem>>, %arg3: memref<32x256xbf16, #tpu.memory_space<vmem>>, %arg4: memref<16x8xf32, #tpu.memory_space<vmem>>, %arg5: memref<8x16xf32, #tpu.memory_space<vmem>>, %arg6: memref<16x128xf32, #tpu.memory_space<vmem>>) attributes {dimension_semantics = [#tpu.dimension_semantics<parallel>], iteration_bounds = array<i64: 1>, scalar_prefetch = 0 : i64, scratch_operands = 0 : i64, tpu.core_type = #tpu.core_type<tc>, window_params = [{transform_indices = @transform_0, window_bounds = array<i64: 16, 32>}, {pipeline_mode = #tpu.pipeline_mode<synchronous>, transform_indices = @transform_1, window_bounds = array<i64: 16, 32>}, {pipeline_mode = #tpu.pipeline_mode<synchronous>, transform_indices = @transform_2, window_bounds = array<i64: 32, 256>}, {transform_indices = @transform_3, window_bounds = array<i64: 16, 8>}, {pipeline_mode = #tpu.pipeline_mode<synchronous>, transform_indices = @transform_4, window_bounds = array<i64: 8, 16>}, {transform_indices = @transform_5, window_bounds = array<i64: 16, 128>}]} {
    %c0 = arith.constant 0 : index
    %c0_0 = arith.constant 0 : index
    %0 = vector.load %arg1[%c0, %c0_0] : memref<16x32xbf16, #tpu.memory_space<vmem>>, vector<16x32xbf16>
    %c0_1 = arith.constant 0 : index
    %c0_2 = arith.constant 0 : index
    %1 = vector.load %arg2[%c0_1, %c0_2] : memref<16x32xbf16, #tpu.memory_space<vmem>>, vector<16x32xbf16>
    %c0_3 = arith.constant 0 : index
    %c0_4 = arith.constant 0 : index
    %2 = vector.load %arg4[%c0_3, %c0_4] : memref<16x8xf32, #tpu.memory_space<vmem>>, vector<16x8xf32>
    %c0_5 = arith.constant 0 : index
    %c0_6 = arith.constant 0 : index
    %3 = vector.load %arg5[%c0_5, %c0_6] : memref<8x16xf32, #tpu.memory_space<vmem>>, vector<8x16xf32>
    %c0_7 = arith.constant 0 : index
    %c0_8 = arith.constant 0 : index
    %4 = vector.load %arg3[%c0_7, %c0_8] : memref<32x256xbf16, #tpu.memory_space<vmem>>, vector<32x256xbf16>
    %cst = arith.constant dense<0.000000e+00> : vector<16x256xf32>
    %5 = tpu.matmul %0, %4, %cst {dimension_numbers = #tpu.dot_dimension_numbers<[1], [0], [0], [1], [0, 0, 1, 1], [], []>} : vector<16x32xbf16>, vector<32x256xbf16>, vector<16x256xf32> -> vector<16x256xf32>
    %6 = vector.extract_strided_slice %5 {offsets = [0, 0], sizes = [16, 32], strides = [1, 1]} : vector<16x256xf32> to vector<16x32xf32>
    %7 = arith.truncf %6 : vector<16x32xf32> to vector<16x32xbf16>
    %cst_9 = arith.constant dense<0.000000e+00> : vector<16x16xf32>
    %8 = tpu.matmul %7, %1, %cst_9 {dimension_numbers = #tpu.dot_dimension_numbers<[1], [1], [0], [0], [0, 0, 1, 0], [], []>} : vector<16x32xbf16>, vector<16x32xbf16>, vector<16x16xf32> -> vector<16x16xf32>
    %9 = vector.extract_strided_slice %2 {offsets = [0, 0], sizes = [16, 1], strides = [1, 1]} : vector<16x8xf32> to vector<16x1xf32>
    %10 = vector.broadcast %9 : vector<16x1xf32> to vector<16x16xf32>
    %11 = arith.addf %8, %10 : vector<16x16xf32>
    %12 = vector.extract_strided_slice %3 {offsets = [0, 0], sizes = [1, 16], strides = [1, 1]} : vector<8x16xf32> to vector<1x16xf32>
    %13 = vector.broadcast %12 : vector<1x16xf32> to vector<16x16xf32>
    %14 = arith.addf %11, %13 : vector<16x16xf32>
    %15 = vector.extract_strided_slice %5 {offsets = [0, 32], sizes = [16, 32], strides = [1, 1]} : vector<16x256xf32> to vector<16x32xf32>
    %16 = arith.truncf %15 : vector<16x32xf32> to vector<16x32xbf16>
    %cst_10 = arith.constant dense<0.000000e+00> : vector<16x16xf32>
    %17 = tpu.matmul %16, %1, %cst_10 {dimension_numbers = #tpu.dot_dimension_numbers<[1], [1], [0], [0], [0, 0, 1, 0], [], []>} : vector<16x32xbf16>, vector<16x32xbf16>, vector<16x16xf32> -> vector<16x16xf32>
    %18 = vector.extract_strided_slice %2 {offsets = [0, 1], sizes = [16, 1], strides = [1, 1]} : vector<16x8xf32> to vector<16x1xf32>
    %19 = vector.broadcast %18 : vector<16x1xf32> to vector<16x16xf32>
    %20 = arith.addf %17, %19 : vector<16x16xf32>
    %21 = vector.extract_strided_slice %3 {offsets = [1, 0], sizes = [1, 16], strides = [1, 1]} : vector<8x16xf32> to vector<1x16xf32>
    %22 = vector.broadcast %21 : vector<1x16xf32> to vector<16x16xf32>
    %23 = arith.addf %20, %22 : vector<16x16xf32>
    %24 = vector.extract_strided_slice %5 {offsets = [0, 64], sizes = [16, 32], strides = [1, 1]} : vector<16x256xf32> to vector<16x32xf32>
    %25 = arith.truncf %24 : vector<16x32xf32> to vector<16x32xbf16>
    %cst_11 = arith.constant dense<0.000000e+00> : vector<16x16xf32>
    %26 = tpu.matmul %25, %1, %cst_11 {dimension_numbers = #tpu.dot_dimension_numbers<[1], [1], [0], [0], [0, 0, 1, 0], [], []>} : vector<16x32xbf16>, vector<16x32xbf16>, vector<16x16xf32> -> vector<16x16xf32>
    %27 = vector.extract_strided_slice %2 {offsets = [0, 2], sizes = [16, 1], strides = [1, 1]} : vector<16x8xf32> to vector<16x1xf32>
    %28 = vector.broadcast %27 : vector<16x1xf32> to vector<16x16xf32>
    %29 = arith.addf %26, %28 : vector<16x16xf32>
    %30 = vector.extract_strided_slice %3 {offsets = [2, 0], sizes = [1, 16], strides = [1, 1]} : vector<8x16xf32> to vector<1x16xf32>
    %31 = vector.broadcast %30 : vector<1x16xf32> to vector<16x16xf32>
    %32 = arith.addf %29, %31 : vector<16x16xf32>
    %33 = vector.extract_strided_slice %5 {offsets = [0, 96], sizes = [16, 32], strides = [1, 1]} : vector<16x256xf32> to vector<16x32xf32>
    %34 = arith.truncf %33 : vector<16x32xf32> to vector<16x32xbf16>
    %cst_12 = arith.constant dense<0.000000e+00> : vector<16x16xf32>
    %35 = tpu.matmul %34, %1, %cst_12 {dimension_numbers = #tpu.dot_dimension_numbers<[1], [1], [0], [0], [0, 0, 1, 0], [], []>} : vector<16x32xbf16>, vector<16x32xbf16>, vector<16x16xf32> -> vector<16x16xf32>
    %36 = vector.extract_strided_slice %2 {offsets = [0, 3], sizes = [16, 1], strides = [1, 1]} : vector<16x8xf32> to vector<16x1xf32>
    %37 = vector.broadcast %36 : vector<16x1xf32> to vector<16x16xf32>
    %38 = arith.addf %35, %37 : vector<16x16xf32>
    %39 = vector.extract_strided_slice %3 {offsets = [3, 0], sizes = [1, 16], strides = [1, 1]} : vector<8x16xf32> to vector<1x16xf32>
    %40 = vector.broadcast %39 : vector<1x16xf32> to vector<16x16xf32>
    %41 = arith.addf %38, %40 : vector<16x16xf32>
    %42 = vector.extract_strided_slice %5 {offsets = [0, 128], sizes = [16, 32], strides = [1, 1]} : vector<16x256xf32> to vector<16x32xf32>
    %43 = arith.truncf %42 : vector<16x32xf32> to vector<16x32xbf16>
    %cst_13 = arith.constant dense<0.000000e+00> : vector<16x16xf32>
    %44 = tpu.matmul %43, %1, %cst_13 {dimension_numbers = #tpu.dot_dimension_numbers<[1], [1], [0], [0], [0, 0, 1, 0], [], []>} : vector<16x32xbf16>, vector<16x32xbf16>, vector<16x16xf32> -> vector<16x16xf32>
    %45 = vector.extract_strided_slice %2 {offsets = [0, 4], sizes = [16, 1], strides = [1, 1]} : vector<16x8xf32> to vector<16x1xf32>
    %46 = vector.broadcast %45 : vector<16x1xf32> to vector<16x16xf32>
    %47 = arith.addf %44, %46 : vector<16x16xf32>
    %48 = vector.extract_strided_slice %3 {offsets = [4, 0], sizes = [1, 16], strides = [1, 1]} : vector<8x16xf32> to vector<1x16xf32>
    %49 = vector.broadcast %48 : vector<1x16xf32> to vector<16x16xf32>
    %50 = arith.addf %47, %49 : vector<16x16xf32>
    %51 = vector.extract_strided_slice %5 {offsets = [0, 160], sizes = [16, 32], strides = [1, 1]} : vector<16x256xf32> to vector<16x32xf32>
    %52 = arith.truncf %51 : vector<16x32xf32> to vector<16x32xbf16>
    %cst_14 = arith.constant dense<0.000000e+00> : vector<16x16xf32>
    %53 = tpu.matmul %52, %1, %cst_14 {dimension_numbers = #tpu.dot_dimension_numbers<[1], [1], [0], [0], [0, 0, 1, 0], [], []>} : vector<16x32xbf16>, vector<16x32xbf16>, vector<16x16xf32> -> vector<16x16xf32>
    %54 = vector.extract_strided_slice %2 {offsets = [0, 5], sizes = [16, 1], strides = [1, 1]} : vector<16x8xf32> to vector<16x1xf32>
    %55 = vector.broadcast %54 : vector<16x1xf32> to vector<16x16xf32>
    %56 = arith.addf %53, %55 : vector<16x16xf32>
    %57 = vector.extract_strided_slice %3 {offsets = [5, 0], sizes = [1, 16], strides = [1, 1]} : vector<8x16xf32> to vector<1x16xf32>
    %58 = vector.broadcast %57 : vector<1x16xf32> to vector<16x16xf32>
    %59 = arith.addf %56, %58 : vector<16x16xf32>
    %60 = vector.extract_strided_slice %5 {offsets = [0, 192], sizes = [16, 32], strides = [1, 1]} : vector<16x256xf32> to vector<16x32xf32>
    %61 = arith.truncf %60 : vector<16x32xf32> to vector<16x32xbf16>
    %cst_15 = arith.constant dense<0.000000e+00> : vector<16x16xf32>
    %62 = tpu.matmul %61, %1, %cst_15 {dimension_numbers = #tpu.dot_dimension_numbers<[1], [1], [0], [0], [0, 0, 1, 0], [], []>} : vector<16x32xbf16>, vector<16x32xbf16>, vector<16x16xf32> -> vector<16x16xf32>
    %63 = vector.extract_strided_slice %2 {offsets = [0, 6], sizes = [16, 1], strides = [1, 1]} : vector<16x8xf32> to vector<16x1xf32>
    %64 = vector.broadcast %63 : vector<16x1xf32> to vector<16x16xf32>
    %65 = arith.addf %62, %64 : vector<16x16xf32>
    %66 = vector.extract_strided_slice %3 {offsets = [6, 0], sizes = [1, 16], strides = [1, 1]} : vector<8x16xf32> to vector<1x16xf32>
    %67 = vector.broadcast %66 : vector<1x16xf32> to vector<16x16xf32>
    %68 = arith.addf %65, %67 : vector<16x16xf32>
    %69 = vector.extract_strided_slice %5 {offsets = [0, 224], sizes = [16, 32], strides = [1, 1]} : vector<16x256xf32> to vector<16x32xf32>
    %70 = arith.truncf %69 : vector<16x32xf32> to vector<16x32xbf16>
    %cst_16 = arith.constant dense<0.000000e+00> : vector<16x16xf32>
    %71 = tpu.matmul %70, %1, %cst_16 {dimension_numbers = #tpu.dot_dimension_numbers<[1], [1], [0], [0], [0, 0, 1, 0], [], []>} : vector<16x32xbf16>, vector<16x32xbf16>, vector<16x16xf32> -> vector<16x16xf32>
    %72 = vector.extract_strided_slice %2 {offsets = [0, 7], sizes = [16, 1], strides = [1, 1]} : vector<16x8xf32> to vector<16x1xf32>
    %73 = vector.broadcast %72 : vector<16x1xf32> to vector<16x16xf32>
    %74 = arith.addf %71, %73 : vector<16x16xf32>
    %75 = vector.extract_strided_slice %3 {offsets = [7, 0], sizes = [1, 16], strides = [1, 1]} : vector<8x16xf32> to vector<1x16xf32>
    %76 = vector.broadcast %75 : vector<1x16xf32> to vector<16x16xf32>
    %77 = arith.addf %74, %76 : vector<16x16xf32>
    %78 = tpu.concatenate %14, %23, %32, %41, %50, %59, %68, %77 in 1 : vector<16x16xf32>, vector<16x16xf32>, vector<16x16xf32>, vector<16x16xf32>, vector<16x16xf32>, vector<16x16xf32>, vector<16x16xf32>, vector<16x16xf32> -> vector<16x128xf32>
    %c0_17 = arith.constant 0 : index
    %c0_18 = arith.constant 0 : index
    %79 = vector.load %arg6[%c0_17, %c0_18] : memref<16x128xf32, #tpu.memory_space<vmem>>, vector<16x128xf32>
    tpu.vector_store %arg6[%c0_17, %c0_18], %78 {strides = array<i32>} : memref<16x128xf32, #tpu.memory_space<vmem>>, vector<16x128xf32>,
    return
  }
  func.func @transform_0(%arg0: i32) -> (i32, i32) {
    %c0_i32 = arith.constant 0 : i32
    %c0_i32_0 = arith.constant 0 : i32
    return %arg0, %c0_i32 : i32, i32
  }
  func.func @transform_1(%arg0: i32) -> (i32, i32) {
    %c0_i32 = arith.constant 0 : i32
    %c0_i32_0 = arith.constant 0 : i32
    %c0_i32_1 = arith.constant 0 : i32
    return %c0_i32, %c0_i32_0 : i32, i32
  }
  func.func @transform_2(%arg0: i32) -> (i32, i32) {
    %c0_i32 = arith.constant 0 : i32
    %c0_i32_0 = arith.constant 0 : i32
    %c0_i32_1 = arith.constant 0 : i32
    return %c0_i32, %c0_i32_0 : i32, i32
  }
  func.func @transform_3(%arg0: i32) -> (i32, i32) {
    %c0_i32 = arith.constant 0 : i32
    %c0_i32_0 = arith.constant 0 : i32
    return %arg0, %c0_i32 : i32, i32
  }
  func.func @transform_4(%arg0: i32) -> (i32, i32) {
    %c0_i32 = arith.constant 0 : i32
    %c0_i32_0 = arith.constant 0 : i32
    %c0_i32_1 = arith.constant 0 : i32
    return %c0_i32, %c0_i32_0 : i32, i32
  }
  func.func @transform_5(%arg0: i32) -> (i32, i32) {
    %c0_i32 = arith.constant 0 : i32
    %c0_i32_0 = arith.constant 0 : i32
    return %arg0, %c0_i32 : i32, i32
  }
}

</mosaic_0001>

<llo_original>
// kernel: biaffine_dependency.2
$region0: #{biaffine_dependency.2}
  #allocation0 [shape = 'u32[]', space=smem, size = 0x4, offset = 0x4, fixed_abs, tag = 'smem constant byte address 0x4 - core index']
  #allocation1 [shape = 'u32[72,128]{1,0:T(1,128)}', space=vmem, size = 0x9000, scoped, tag = 'internal scratch']
  %s0 = inlined_call_operand.vmem [shape: f32[16,32], index: 0, kind: input, shape index: {}]
  %s1 = inlined_call_operand.vmem [shape: f32[32,32], index: 1, kind: input, shape index: {}]
  %s2 = inlined_call_operand.hbm [shape: f32[1,32], index: 2, kind: input, shape index: {}]
  %s3 = inlined_call_operand.hbm [shape: f32[32,32], index: 3, kind: input, shape index: {}]
  %s4 = inlined_call_operand.hbm [shape: f32[1,32], index: 4, kind: input, shape index: {}]
  %s5 = inlined_call_operand.vmem [shape: f32[32,8], index: 5, kind: input, shape index: {}]
  %s6 = inlined_call_operand.hbm [shape: f32[8,32], index: 6, kind: input, shape index: {}]
  %s7 = inlined_call_operand.vmem [shape: f32[8,1], index: 7, kind: input, shape index: {}]
  %s8 = inlined_call_operand.vmem [shape: bf16[16,32], index: 8, kind: output, shape index: {0}]
  %s9 = inlined_call_operand.vmem [shape: bf16[16,32], index: 9, kind: output, shape index: {1}]
  %s10 = inlined_call_operand.vmem [shape: f32[16,8], index: 10, kind: output, shape index: {2}]
  %s11 = inlined_call_operand.vmem [shape: f32[8,16], index: 11, kind: output, shape index: {3}]
  %12 = xla_tuple %s8, %s9, %s10, %s11
  %s13 = sld [smem:[#allocation0]]
  $region82: #{biaffine_dependency.2} parent=0
    _
  %s15 = ssub.s32 1, %s13
  %s16 = scalar_select 0, %s15, %s13
  $region1: #{biaffine_dependency.2} parent=0
    #allocation2 [shape = 'u8[512]{0}', space=vmem, size = 0x400, scoped, tag = 'input window, operand 2, single buffered']
    #allocation3 [shape = 's32[1]{0}', space=sflag, size = 0x4, scoped, tag = 'scoped memory for biaffine_dependency.2']
    #allocation4 [shape = 'u8[16384]{0}', space=vmem, size = 0x4000, scoped, tag = 'input window, operand 3, single buffered']
    #allocation5 [shape = 's32[1]{0}', space=sflag, size = 0x4, scoped, tag = 'scoped memory for biaffine_dependency.2']
    #allocation6 [shape = 'u8[512]{0}', space=vmem, size = 0x400, scoped, tag = 'input window, operand 4, single buffered']
    #allocation7 [shape = 'u8[4096]{0}', space=vmem, size = 0x1000, scoped, tag = 'input window, operand 6, single buffered']
    #allocation8 [shape = 's32[1]{0}', space=sflag, size = 0x4, scoped, tag = 'scoped memory for biaffine_dependency.2']
    %17 = vsyncpa [#allocation3], 0
    %18 = vsyncpa [#allocation5], 0
    %19 = vsyncpa [#allocation8], 0
    // Predicated region
    $region2: #{biaffine_dependency.2} parent=1 // pred_check
      _
    $region3: #{biaffine_dependency.2} parent=1 // pred_check_branch
      %21 = sbr.rel (0) target = $region5
    $region4: #{biaffine_dependency.2} parent=1 // pred_region
      _
    $region5: #{biaffine_dependency.2} parent=1 // pred_fallthru
      _
    // Predicated region
    $region6: #{biaffine_dependency.2} parent=1 // pred_check
      _
    $region7: #{biaffine_dependency.2} parent=1 // pred_check_branch
      %23 = sbr.rel (0) target = $region9
    $region8: #{biaffine_dependency.2} parent=1 // pred_region
      _
    $region9: #{biaffine_dependency.2} parent=1 // pred_fallthru
      _
    // Predicated region
    $region10: #{biaffine_dependency.2} parent=1 // pred_check
      _
    $region11: #{biaffine_dependency.2} parent=1 // pred_check_branch
      %25 = sbr.rel (0) target = $region13
    $region12: #{biaffine_dependency.2} parent=1 // pred_region
      %27 = vsyncadd [#allocation3], 0
      %s29 = sshll.u32 %s2, 4
      %s30 = int_to_ptr.hbm [resolvable:$true] %s29
      %s31 = sshll.u32 [#allocation2], 4
      %s32 = int_to_ptr.vmem [resolvable:$true] %s31
      %34 = dma.hbm_to_vmem [thread:$0]  %s30, 16, %s32, [#allocation3]
    $region13: #{biaffine_dependency.2} parent=1 // pred_fallthru
      _
    // Predicated region
    $region14: #{biaffine_dependency.2} parent=1 // pred_check
      _
    $region15: #{biaffine_dependency.2} parent=1 // pred_check_branch
      %36 = sbr.rel (0) target = $region17
    $region16: #{biaffine_dependency.2} parent=1 // pred_region
      %38 = vsyncadd [#allocation5], 0
      %s39 = sshll.u32 %s3, 4
      %s40 = int_to_ptr.hbm [resolvable:$true] %s39
      %s41 = sshll.u32 [#allocation4], 4
      %s42 = int_to_ptr.vmem [resolvable:$true] %s41
      %47 = dma.hbm_to_vmem [thread:$0]  %s40, 512, %s42, [#allocation5], 128, 128, 8
    $region17: #{biaffine_dependency.2} parent=1 // pred_fallthru
      _
    // Predicated region
    $region18: #{biaffine_dependency.2} parent=1 // pred_check
      _
    $region19: #{biaffine_dependency.2} parent=1 // pred_check_branch
      %49 = sbr.rel (0) target = $region21
    $region20: #{biaffine_dependency.2} parent=1 // pred_region
      %51 = vsyncadd [#allocation5], 0
      %s53 = sshll.u32 %s4, 4
      %s54 = int_to_ptr.hbm [resolvable:$true] %s53
      %s55 = sshll.u32 [#allocation6], 4
      %s56 = int_to_ptr.vmem [resolvable:$true] %s55
      %58 = dma.hbm_to_vmem [thread:$0]  %s54, 16, %s56, [#allocation5]
    $region21: #{biaffine_dependency.2} parent=1 // pred_fallthru
      _
    // Predicated region
    $region22: #{biaffine_dependency.2} parent=1 // pred_check
      _
    $region23: #{biaffine_dependency.2} parent=1 // pred_check_branch
      %60 = sbr.rel (0) target = $region25
    $region24: #{biaffine_dependency.2} parent=1 // pred_region
      _
    $region25: #{biaffine_dependency.2} parent=1 // pred_fallthru
      _
    // Predicated region
    $region26: #{biaffine_dependency.2} parent=1 // pred_check
      _
    $region27: #{biaffine_dependency.2} parent=1 // pred_check_branch
      %62 = sbr.rel (0) target = $region29
    $region28: #{biaffine_dependency.2} parent=1 // pred_region
      %64 = vsyncadd [#allocation8], 0
      %s66 = sshll.u32 %s6, 4
      %s67 = int_to_ptr.hbm [resolvable:$true] %s66
      %s68 = sshll.u32 [#allocation7], 4
      %s69 = int_to_ptr.vmem [resolvable:$true] %s68
      %71 = dma.hbm_to_vmem [thread:$0]  %s67, 128, %s69, [#allocation8]
    $region29: #{biaffine_dependency.2} parent=1 // pred_fallthru
      _
    // Predicated region
    $region30: #{biaffine_dependency.2} parent=1 // pred_check
      _
    $region31: #{biaffine_dependency.2} parent=1 // pred_check_branch
      %73 = sbr.rel (0) target = $region33
    $region32: #{biaffine_dependency.2} parent=1 // pred_region
      _
    $region33: #{biaffine_dependency.2} parent=1 // pred_fallthru
      _
    // Predicated region
    $region34: #{biaffine_dependency.2} parent=1 // pred_check
      _
    $region35: #{biaffine_dependency.2} parent=1 // pred_check_branch
      %75 = sbr.rel (0) target = $region37
    $region36: #{biaffine_dependency.2} parent=1 // pred_region
      %77 = dma.done [#allocation3], 16
    $region37: #{biaffine_dependency.2} parent=1 // pred_fallthru
      _
    // Predicated region
    $region38: #{biaffine_dependency.2} parent=1 // pred_check
      _
    $region39: #{biaffine_dependency.2} parent=1 // pred_check_branch
      %79 = sbr.rel (0) target = $region41
    $region40: #{biaffine_dependency.2} parent=1 // pred_region
      %81 = dma.done [#allocation5], 512
    $region41: #{biaffine_dependency.2} parent=1 // pred_fallthru
      _
    // Predicated region
    $region42: #{biaffine_dependency.2} parent=1 // pred_check
      _
    $region43: #{biaffine_dependency.2} parent=1 // pred_check_branch
      %83 = sbr.rel (0) target = $region45
    $region44: #{biaffine_dependency.2} parent=1 // pred_region
      %85 = dma.done [#allocation5], 16
    $region45: #{biaffine_dependency.2} parent=1 // pred_fallthru
      _
    // Predicated region
    $region46: #{biaffine_dependency.2} parent=1 // pred_check
      _
    $region47: #{biaffine_dependency.2} parent=1 // pred_check_branch
      %87 = sbr.rel (0) target = $region49
    $region48: #{biaffine_dependency.2} parent=1 // pred_region
      %89 = dma.done [#allocation8], 128
    $region49: #{biaffine_dependency.2} parent=1 // pred_fallthru
      _
    %v90 = vld [vmem:[%s0] sm:$0xff]
    %v91 = vld [vmem:[%s0 + $0x8] sm:$0xff]
    %v92 = vld [vmem:[%s1] sm:$0xff]
    %v93 = vld [vmem:[%s1 + $0x8] sm:$0xff]
    %v94 = vld [vmem:[%s1 + $0x10] sm:$0xff]
    %v95 = vld [vmem:[%s1 + $0x18] sm:$0xff]
    %v96 = vld [vmem:[#allocation2] sm:$0x1]
    %v98 = vperm.slane %v96, 0
    %vm100 = vcmask 261120
    %v102 = vsel %vm100, %v90, 0
    %v105 = vsel %vm100, %v91, 0
    %107 = vmatpush.msra.mxu0 0.0
    %108 = vmatpush.msra.mxu0 0.0
    %109 = vmatpush.msra.mxu0 0.0
    %110 = vmatpush.msra.mxu0 0.0
    %111 = vmatpush.msra.mxu0 0.0
    %112 = vmatpush.msra.mxu0 0.0
    %113 = vmatpush.msra.mxu0 0.0
    %114 = vmatpush.msra.mxu0 0.0
    %115 = vmatpush.msra.mxu0 0.0
    %116 = vmatpush.msra.mxu0 0.0
    %117 = vmatpush.msra.mxu0 0.0
    %118 = vmatpush.msra.mxu0 0.0
    %119 = vmatpush.msra.mxu0 %v95
    %120 = vmatpush.msra.mxu0 %v94
    %121 = vmatpush.msra.mxu0 %v93
    %122 = vmatpush.msra.mxu0 %v92
    %123 = vmatmul.f32.gmra.mxu0 %v102
    %v124 = vpop.f32.mrf.mxu0
    %v125 = vadd.f32 %v98, %v124
    %126 = vmatmul.f32.gmra.mxu0 %v105
    %v127 = vpop.f32.mrf.mxu0
    %v128 = vadd.f32 %v98, %v127
    %129 = vdwg.mxu0
    %v130 = vtanh.pop %v125
    %v131 = vtanh.pop %v128
    %v132 = vld [vmem:[#allocation4] sm:$0xff]
    %v133 = vld [vmem:[#allocation4 + $0x8] sm:$0xff]
    %v134 = vld [vmem:[#allocation4 + $0x10] sm:$0xff]
    %v135 = vld [vmem:[#allocation4 + $0x18] sm:$0xff]
    %v136 = vld [vmem:[#allocation6] sm:$0x1]
    %v138 = vperm.slane %v136, 0
    %140 = vmatpush.msra.mxu0 0.0
    %141 = vmatpush.msra.mxu0 0.0
    %142 = vmatpush.msra.mxu0 0.0
    %143 = vmatpush.msra.mxu0 0.0
    %144 = vmatpush.msra.mxu0 0.0
    %145 = vmatpush.msra.mxu0 0.0
    %146 = vmatpush.msra.mxu0 0.0
    %147 = vmatpush.msra.mxu0 0.0
    %148 = vmatpush.msra.mxu0 0.0
    %149 = vmatpush.msra.mxu0 0.0
    %150 = vmatpush.msra.mxu0 0.0
    %151 = vmatpush.msra.mxu0 0.0
    %152 = vmatpush.msra.mxu0 %v135
    %153 = vmatpush.msra.mxu0 %v134
    %154 = vmatpush.msra.mxu0 %v133
    %155 = vmatpush.msra.mxu0 %v132
    %156 = vmatmul.f32.gmra.mxu0 %v102
    %v157 = vpop.f32.mrf.mxu0
    %v158 = vadd.f32 %v138, %v157
    %159 = vmatmul.f32.gmra.mxu0 %v105
    %v160 = vpop.f32.mrf.mxu0
    %v161 = vadd.f32 %v138, %v160
    %162 = vdwg.mxu0
    %v163 = vtanh.pop %v158
    %v164 = vtanh.pop %v161
    %v165 = vpack.c.bf16 %v130, %v130
    %v166 = vpack.c.bf16 %v131, %v131
    %vm167 = vcmask 257024
    %168 = vst.msk [vmem:[%s8] sm:$0xf] %vm167, %v165
    %169 = vst.msk [vmem:[%s8 + $0x4] sm:$0xf] %vm167, %v166
    %v170 = vpack.c.bf16 %v163, %v163
    %v171 = vpack.c.bf16 %v164, %v164
    %172 = vst.msk [vmem:[%s9] sm:$0xf] %vm167, %v170
    %173 = vst.msk [vmem:[%s9 + $0x4] sm:$0xf] %vm167, %v171
    %v174 = vld [vmem:[%s5] sm:$0xff]
    %v175 = vld [vmem:[%s5 + $0x8] sm:$0xff]
    %v176 = vld [vmem:[%s5 + $0x10] sm:$0xff]
    %v177 = vld [vmem:[%s5 + $0x18] sm:$0xff]
    %v179 = vsel %vm100, %v130, 0
    %v182 = vsel %vm100, %v131, 0
    %184 = vmatpush.msra.mxu0 0.0
    %185 = vmatpush.msra.mxu0 0.0
    %186 = vmatpush.msra.mxu0 0.0
    %187 = vmatpush.msra.mxu0 0.0
    %188 = vmatpush.msra.mxu0 0.0
    %189 = vmatpush.msra.mxu0 0.0
    %190 = vmatpush.msra.mxu0 0.0
    %191 = vmatpush.msra.mxu0 0.0
    %192 = vmatpush.msra.mxu0 0.0
    %193 = vmatpush.msra.mxu0 0.0
    %194 = vmatpush.msra.mxu0 0.0
    %195 = vmatpush.msra.mxu0 0.0
    %196 = vmatpush.msra.mxu0 %v177
    %197 = vmatpush.msra.mxu0 %v176
    %198 = vmatpush.msra.mxu0 %v175
    %199 = vmatpush.msra.mxu0 %v174
    %200 = vmatmul.f32.gmra.mxu0 %v179
    %v201 = vpop.f32.mrf.mxu0
    %v202 = vadd.f32 0.0, %v201
    %203 = vmatmul.f32.gmra.mxu0 %v182
    %v204 = vpop.f32.mrf.mxu0
    %v205 = vadd.f32 0.0, %v204
    %206 = vdwg.mxu0
    %vm207 = vcmask 64512
    %208 = vst.msk [vmem:[%s10] sm:$0xff] %vm207, %v202
    %209 = vst.msk [vmem:[%s10 + $0x8] sm:$0xff] %vm207, %v205
    %v210 = vld [vmem:[#allocation7] sm:$0xff]
    %v211 = vld [vmem:[%s7] sm:$0xff]
    %213 = vset.pattern.permute.xlu0 0
    %214 = vperm.xlu0 %213, %v211
    %v215 = vpop.permute.xlu0 %214
    %v218 = vsel %vm100, %v210, 0
    %v221 = vsel %vm100, %v163, 0
    %v224 = vsel %vm100, %v164, 0
    %226 = vmatpush.xpose.msra.mxu0 0.0
    %227 = vmatpush.xpose.msra.mxu0 0.0
    %228 = vmatpush.xpose.msra.mxu0 0.0
    %229 = vmatpush.xpose.msra.mxu0 0.0
    %230 = vmatpush.xpose.msra.mxu0 0.0
    %231 = vmatpush.xpose.msra.mxu0 0.0
    %232 = vmatpush.xpose.msra.mxu0 0.0
    %233 = vmatpush.xpose.msra.mxu0 0.0
    %234 = vmatpush.xpose.msra.mxu0 0.0
    %235 = vmatpush.xpose.msra.mxu0 0.0
    %236 = vmatpush.xpose.msra.mxu0 0.0
    %237 = vmatpush.xpose.msra.mxu0 0.0
    %238 = vmatpush.xpose.msra.mxu0 0.0
    %239 = vmatpush.xpose.msra.mxu0 0.0
    %240 = vmatpush.xpose.msra.mxu0 %v224
    %241 = vmatpush.xpose.msra.mxu0 %v221
    %242 = vmatmul.f32.gmra.mxu0 %v218
    %v243 = vpop.f32.mrf.mxu0
    %v244 = vadd.f32 %v215, %v243
    %245 = vdwg.mxu0
    %vm246 = vcmask 130048
    %247 = vst.msk [vmem:[%s11] sm:$0xff] %vm246, %v244
    // Predicated region
    $region50: #{biaffine_dependency.2} parent=1 // pred_check
      _
    $region51: #{biaffine_dependency.2} parent=1 // pred_check_branch
      %249 = sbr.rel (0) target = $region53
    $region52: #{biaffine_dependency.2} parent=1 // pred_region
      _
    $region53: #{biaffine_dependency.2} parent=1 // pred_fallthru
      _
    // Predicated region
    $region54: #{biaffine_dependency.2} parent=1 // pred_check
      _
    $region55: #{biaffine_dependency.2} parent=1 // pred_check_branch
      %251 = sbr.rel (0) target = $region57
    $region56: #{biaffine_dependency.2} parent=1 // pred_region
      _
    $region57: #{biaffine_dependency.2} parent=1 // pred_fallthru
      _
    // Predicated region
    $region58: #{biaffine_dependency.2} parent=1 // pred_check
      _
    $region59: #{biaffine_dependency.2} parent=1 // pred_check_branch
      %253 = sbr.rel (0) target = $region61
    $region60: #{biaffine_dependency.2} parent=1 // pred_region
      _
    $region61: #{biaffine_dependency.2} parent=1 // pred_fallthru
      _
    // Predicated region
    $region62: #{biaffine_dependency.2} parent=1 // pred_check
      _
    $region63: #{biaffine_dependency.2} parent=1 // pred_check_branch
      %255 = sbr.rel (0) target = $region65
    $region64: #{biaffine_dependency.2} parent=1 // pred_region
      _
    $region65: #{biaffine_dependency.2} parent=1 // pred_fallthru
      _
    // Predicated region
    $region66: #{biaffine_dependency.2} parent=1 // pred_check
      _
    $region67: #{biaffine_dependency.2} parent=1 // pred_check_branch
      %257 = sbr.rel (0) target = $region69
    $region68: #{biaffine_dependency.2} parent=1 // pred_region
      _
    $region69: #{biaffine_dependency.2} parent=1 // pred_fallthru
      _
    // Predicated region
    $region70: #{biaffine_dependency.2} parent=1 // pred_check
      _
    $region71: #{biaffine_dependency.2} parent=1 // pred_check_branch
      %259 = sbr.rel (0) target = $region73
    $region72: #{biaffine_dependency.2} parent=1 // pred_region
      _
    $region73: #{biaffine_dependency.2} parent=1 // pred_fallthru
      _
    // Predicated region
    $region74: #{biaffine_dependency.2} parent=1 // pred_check
      _
    $region75: #{biaffine_dependency.2} parent=1 // pred_check_branch
      %261 = sbr.rel (0) target = $region77
    $region76: #{biaffine_dependency.2} parent=1 // pred_region
      _
    $region77: #{biaffine_dependency.2} parent=1 // pred_fallthru
      _
    // Predicated region
    $region78: #{biaffine_dependency.2} parent=1 // pred_check
      _
    $region79: #{biaffine_dependency.2} parent=1 // pred_check_branch
      %263 = sbr.rel (0) target = $region81
    $region80: #{biaffine_dependency.2} parent=1 // pred_region
      _
    $region81: #{biaffine_dependency.2} parent=1 // pred_fallthru
      _
    %264 = vsyncpa [#allocation3], 1
    %265 = vsyncpa [#allocation5], 1
    %266 = vsyncpa [#allocation8], 1

// kernel: biaffine_dependency.3
$region0: #{biaffine_dependency.3}
  #allocation0 [shape = 'u32[]', space=smem, size = 0x4, offset = 0x4, fixed_abs, tag = 'smem constant byte address 0x4 - core index']
  #allocation1 [shape = 'u32[72,128]{1,0:T(1,128)}', space=vmem, size = 0x9000, scoped, tag = 'internal scratch']
  %s0 = inlined_call_operand.vmem [shape: bf16[16,32], index: 0, kind: input, shape index: {}]
  %s1 = inlined_call_operand.vmem [shape: bf16[16,32], index: 1, kind: input, shape index: {}]
  %s2 = inlined_call_operand.vmem [shape: bf16[32,256], index: 2, kind: input, shape index: {}]
  %s3 = inlined_call_operand.vmem [shape: f32[16,8], index: 3, kind: input, shape index: {}]
  %s4 = inlined_call_operand.vmem [shape: f32[8,16], index: 4, kind: input, shape index: {}]
  %s5 = inlined_call_operand.vmem [shape: f32[16,128], index: 5, kind: output, shape index: {}]
  %s6 = sld [smem:[#allocation0]]
  $region30: #{biaffine_dependency.3} parent=0
    _
  %s8 = ssub.s32 1, %s6
  %s9 = scalar_select 0, %s8, %s6
  // Predicated region
  $region2: #{biaffine_dependency.3} parent=0 // pred_check
    _
  $region3: #{biaffine_dependency.3} parent=0 // pred_check_branch
    %11 = sbr.rel (0) target = $region5
  $region4: #{biaffine_dependency.3} parent=0 // pred_region
    _
  $region5: #{biaffine_dependency.3} parent=0 // pred_fallthru
    _
  // Predicated region
  $region6: #{biaffine_dependency.3} parent=0 // pred_check
    _
  $region7: #{biaffine_dependency.3} parent=0 // pred_check_branch
    %13 = sbr.rel (0) target = $region9
  $region8: #{biaffine_dependency.3} parent=0 // pred_region
    _
  $region9: #{biaffine_dependency.3} parent=0 // pred_fallthru
    _
  // Predicated region
  $region10: #{biaffine_dependency.3} parent=0 // pred_check
    _
  $region11: #{biaffine_dependency.3} parent=0 // pred_check_branch
    %15 = sbr.rel (0) target = $region13
  $region12: #{biaffine_dependency.3} parent=0 // pred_region
    _
  $region13: #{biaffine_dependency.3} parent=0 // pred_fallthru
    _
  // Predicated region
  $region14: #{biaffine_dependency.3} parent=0 // pred_check
    _
  $region15: #{biaffine_dependency.3} parent=0 // pred_check_branch
    %17 = sbr.rel (0) target = $region17
  $region16: #{biaffine_dependency.3} parent=0 // pred_region
    _
  $region17: #{biaffine_dependency.3} parent=0 // pred_fallthru
    _
  // Predicated region
  $region18: #{biaffine_dependency.3} parent=0 // pred_check
    _
  $region19: #{biaffine_dependency.3} parent=0 // pred_check_branch
    %19 = sbr.rel (0) target = $region21
  $region20: #{biaffine_dependency.3} parent=0 // pred_region
    _
  $region21: #{biaffine_dependency.3} parent=0 // pred_fallthru
    _
  %v21 = vld [vmem:[%s0] sm:$0xf]
  %v22 = vld [vmem:[%s0 + $0x4] sm:$0xf]
  %v23 = vld [vmem:[%s1] sm:$0xf]
  %v24 = vld [vmem:[%s1 + $0x4] sm:$0xf]
  %v25 = vld [vmem:[%s3] sm:$0xff]
  %v26 = vld [vmem:[%s3 + $0x8] sm:$0xff]
  %v27 = vld [vmem:[%s4] sm:$0xff]
  %v28 = vld [vmem:[%s2] sm:$0xff]
  %v29 = vld [vmem:[%s2 + $0x8] sm:$0xff]
  %v30 = vld [vmem:[%s2 + $0x10] sm:$0xff]
  %v31 = vld [vmem:[%s2 + $0x18] sm:$0xff]
  %v34 = vunpack.c.l.b16 %v21
  %v35 = vunpack.c.l.b16 %v22
  %v36 = vpack.c.b16 %v35, %v34
  %v41 = vunpack.c.l.b16 %v28
  %v42 = vunpack.c.h.b16 %v28
  %v43 = vunpack.c.l.b16 %v29
  %v44 = vunpack.c.h.b16 %v29
  %v45 = vunpack.c.l.b16 %v30
  %v46 = vunpack.c.h.b16 %v30
  %v47 = vunpack.c.l.b16 %v31
  %v48 = vunpack.c.h.b16 %v31
  %v49 = vpack.c.b16 %v43, %v41
  %v50 = vpack.c.b16 %v44, %v42
  %v51 = vpack.c.b16 %v47, %v45
  %v52 = vpack.c.b16 %v48, %v46
  %vm57 = vcmask 261120
  %v59 = vsel %vm57, %v36, 0
  %61 = vmatpush.bf16.msra.mxu0 0
  %62 = vmatpush.bf16.msra.mxu0 0
  %63 = vmatpush.bf16.msra.mxu0 0
  %64 = vmatpush.bf16.msra.mxu0 0
  %65 = vmatpush.bf16.msra.mxu0 0
  %66 = vmatpush.bf16.msra.mxu0 0
  %67 = vmatpush.bf16.msra.mxu0 %v51
  %68 = vmatpush.bf16.msra.mxu0 %v49
  %69 = vmatmul.bf16.gmra.mxu0 %v59
  %v70 = vpop.f32.mrf.mxu0
  %v71 = vadd.f32 0.0, %v70
  %v72 = vpop.f32.mrf.mxu0
  %v73 = vadd.f32 0.0, %v72
  %74 = vdwg.mxu0
  %75 = vmatpush.bf16.msra.mxu0 0
  %76 = vmatpush.bf16.msra.mxu0 0
  %77 = vmatpush.bf16.msra.mxu0 0
  %78 = vmatpush.bf16.msra.mxu0 0
  %79 = vmatpush.bf16.msra.mxu0 0
  %80 = vmatpush.bf16.msra.mxu0 0
  %81 = vmatpush.bf16.msra.mxu0 %v52
  %82 = vmatpush.bf16.msra.mxu0 %v50
  %83 = vmatmul.bf16.gmra.mxu0 %v59
  %v84 = vpop.f32.mrf.mxu0
  %v85 = vadd.f32 0.0, %v84
  %v86 = vpop.f32.mrf.mxu0
  %v87 = vadd.f32 0.0, %v86
  %88 = vdwg.mxu0
  %v89 = vpack.c.bf16 %v73, %v71
  %91 = vset.pattern.permute.xlu0 0
  %92 = vperm.xlu0 %91, %v25
  %v93 = vpop.permute.xlu0 %92
  %96 = vset.pattern.permute.xlu0 0
  %97 = vperm.xlu0 %96, %v26
  %v98 = vpop.permute.xlu0 %97
  %v102 = vunpack.c.l.b16 %v23
  %v103 = vunpack.c.l.b16 %v24
  %v104 = vpack.c.b16 %v103, %v102
  %v106 = vsel %vm57, %v89, 0
  %v109 = vsel %vm57, %v104, 0
  %111 = vmatpush.bf16.xpose.msra.mxu0 0
  %112 = vmatpush.bf16.xpose.msra.mxu0 0
  %113 = vmatpush.bf16.xpose.msra.mxu0 0
  %114 = vmatpush.bf16.xpose.msra.mxu0 0
  %115 = vmatpush.bf16.xpose.msra.mxu0 0
  %116 = vmatpush.bf16.xpose.msra.mxu0 0
  %117 = vmatpush.bf16.xpose.msra.mxu0 0
  %118 = vmatpush.bf16.xpose.msra.mxu0 %v109
  %119 = vmatmul.bf16.gmra.mxu0 %v106
  %v120 = vpop.f32.mrf.mxu0
  %v121 = vadd.f32 %v93, %v120
  %v122 = vpop.f32.mrf.mxu0
  %v123 = vadd.f32 %v98, %v122
  %124 = vdwg.mxu0
  %v125 = vperm.slane %v27, 0
  %v126 = vadd.f32 %v121, %v125
  %v127 = vadd.f32 %v123, %v125
  %128 = vset.pattern.permute.xlu0 1
  %129 = vperm.xlu0 %128, %v25
  %v130 = vpop.permute.xlu0 %129
  %132 = vset.pattern.permute.xlu0 1
  %133 = vperm.xlu0 %132, %v26
  %v134 = vpop.permute.xlu0 %133
  %137 = vrot.lane.b32.xlu0 %v89, 96
  %v138 = vpop.permute.xlu0 %137
  %v140 = vsel %vm57, %v138, 0
  %142 = vmatpush.bf16.xpose.msra.mxu0 0
  %143 = vmatpush.bf16.xpose.msra.mxu0 0
  %144 = vmatpush.bf16.xpose.msra.mxu0 0
  %145 = vmatpush.bf16.xpose.msra.mxu0 0
  %146 = vmatpush.bf16.xpose.msra.mxu0 0
  %147 = vmatpush.bf16.xpose.msra.mxu0 0
  %148 = vmatpush.bf16.xpose.msra.mxu0 0
  %149 = vmatpush.bf16.xpose.msra.mxu0 %v109
  %150 = vmatmul.bf16.gmra.mxu0 %v140
  %v151 = vpop.f32.mrf.mxu0
  %v152 = vadd.f32 %v130, %v151
  %v153 = vpop.f32.mrf.mxu0
  %v154 = vadd.f32 %v134, %v153
  %155 = vdwg.mxu0
  %v156 = vperm.slane %v27, 1
  %v157 = vadd.f32 %v152, %v156
  %v158 = vadd.f32 %v154, %v156
  %159 = vset.pattern.permute.xlu0 2
  %160 = vperm.xlu0 %159, %v25
  %v161 = vpop.permute.xlu0 %160
  %163 = vset.pattern.permute.xlu0 2
  %164 = vperm.xlu0 %163, %v26
  %v165 = vpop.permute.xlu0 %164
  %167 = vrot.lane.b32.xlu0 %v89, 64
  %v168 = vpop.permute.xlu0 %167
  %v170 = vsel %vm57, %v168, 0
  %172 = vmatpush.bf16.xpose.msra.mxu0 0
  %173 = vmatpush.bf16.xpose.msra.mxu0 0
  %174 = vmatpush.bf16.xpose.msra.mxu0 0
  %175 = vmatpush.bf16.xpose.msra.mxu0 0
  %176 = vmatpush.bf16.xpose.msra.mxu0 0
  %177 = vmatpush.bf16.xpose.msra.mxu0 0
  %178 = vmatpush.bf16.xpose.msra.mxu0 0
  %179 = vmatpush.bf16.xpose.msra.mxu0 %v109
  %180 = vmatmul.bf16.gmra.mxu0 %v170
  %v181 = vpop.f32.mrf.mxu0
  %v182 = vadd.f32 %v161, %v181
  %v183 = vpop.f32.mrf.mxu0
  %v184 = vadd.f32 %v165, %v183
  %185 = vdwg.mxu0
  %v186 = vperm.slane %v27, 2
  %v187 = vadd.f32 %v182, %v186
  %v188 = vadd.f32 %v184, %v186
  %189 = vset.pattern.permute.xlu0 3
  %190 = vperm.xlu0 %189, %v25
  %v191 = vpop.permute.xlu0 %190
  %193 = vset.pattern.permute.xlu0 3
  %194 = vperm.xlu0 %193, %v26
  %v195 = vpop.permute.xlu0 %194
  %197 = vrot.lane.b32.xlu0 %v89, 32
  %v198 = vpop.permute.xlu0 %197
  %v200 = vsel %vm57, %v198, 0
  %202 = vmatpush.bf16.xpose.msra.mxu0 0
  %203 = vmatpush.bf16.xpose.msra.mxu0 0
  %204 = vmatpush.bf16.xpose.msra.mxu0 0
  %205 = vmatpush.bf16.xpose.msra.mxu0 0
  %206 = vmatpush.bf16.xpose.msra.mxu0 0
  %207 = vmatpush.bf16.xpose.msra.mxu0 0
  %208 = vmatpush.bf16.xpose.msra.mxu0 0
  %209 = vmatpush.bf16.xpose.msra.mxu0 %v109
  %210 = vmatmul.bf16.gmra.mxu0 %v200
  %v211 = vpop.f32.mrf.mxu0
  %v212 = vadd.f32 %v191, %v211
  %v213 = vpop.f32.mrf.mxu0
  %v214 = vadd.f32 %v195, %v213
  %215 = vdwg.mxu0
  %v216 = vperm.slane %v27, 3
  %v217 = vadd.f32 %v212, %v216
  %v218 = vadd.f32 %v214, %v216
  %v219 = vpack.c.bf16 %v87, %v85
  %220 = vset.pattern.permute.xlu0 4
  %221 = vperm.xlu0 %220, %v25
  %v222 = vpop.permute.xlu0 %221
  %224 = vset.pattern.permute.xlu0 4
  %225 = vperm.xlu0 %224, %v26
  %v226 = vpop.permute.xlu0 %225
  %v229 = vsel %vm57, %v219, 0
  %231 = vmatpush.bf16.xpose.msra.mxu0 0
  %232 = vmatpush.bf16.xpose.msra.mxu0 0
  %233 = vmatpush.bf16.xpose.msra.mxu0 0
  %234 = vmatpush.bf16.xpose.msra.mxu0 0
  %235 = vmatpush.bf16.xpose.msra.mxu0 0
  %236 = vmatpush.bf16.xpose.msra.mxu0 0
  %237 = vmatpush.bf16.xpose.msra.mxu0 0
  %238 = vmatpush.bf16.xpose.msra.mxu0 %v109
  %239 = vmatmul.bf16.gmra.mxu0 %v229
  %v240 = vpop.f32.mrf.mxu0
  %v241 = vadd.f32 %v222, %v240
  %v242 = vpop.f32.mrf.mxu0
  %v243 = vadd.f32 %v226, %v242
  %244 = vdwg.mxu0
  %v245 = vperm.slane %v27, 4
  %v246 = vadd.f32 %v241, %v245
  %v247 = vadd.f32 %v243, %v245
  %248 = vset.pattern.permute.xlu0 5
  %249 = vperm.xlu0 %248, %v25
  %v250 = vpop.permute.xlu0 %249
  %252 = vset.pattern.permute.xlu0 5
  %253 = vperm.xlu0 %252, %v26
  %v254 = vpop.permute.xlu0 %253
  %257 = vrot.lane.b32.xlu0 %v219, 96
  %v258 = vpop.permute.xlu0 %257
  %v260 = vsel %vm57, %v258, 0
  %262 = vmatpush.bf16.xpose.msra.mxu0 0
  %263 = vmatpush.bf16.xpose.msra.mxu0 0
  %264 = vmatpush.bf16.xpose.msra.mxu0 0
  %265 = vmatpush.bf16.xpose.msra.mxu0 0
  %266 = vmatpush.bf16.xpose.msra.mxu0 0
  %267 = vmatpush.bf16.xpose.msra.mxu0 0
  %268 = vmatpush.bf16.xpose.msra.mxu0 0
  %269 = vmatpush.bf16.xpose.msra.mxu0 %v109
  %270 = vmatmul.bf16.gmra.mxu0 %v260
  %v271 = vpop.f32.mrf.mxu0
  %v272 = vadd.f32 %v250, %v271
  %v273 = vpop.f32.mrf.mxu0
  %v274 = vadd.f32 %v254, %v273
  %275 = vdwg.mxu0
  %v276 = vperm.slane %v27, 5
  %v277 = vadd.f32 %v272, %v276
  %v278 = vadd.f32 %v274, %v276
  %279 = vset.pattern.permute.xlu0 6
  %280 = vperm.xlu0 %279, %v25
  %v281 = vpop.permute.xlu0 %280
  %283 = vset.pattern.permute.xlu0 6
  %284 = vperm.xlu0 %283, %v26
  %v285 = vpop.permute.xlu0 %284
  %287 = vrot.lane.b32.xlu0 %v219, 64
  %v288 = vpop.permute.xlu0 %287
  %v290 = vsel %vm57, %v288, 0
  %292 = vmatpush.bf16.xpose.msra.mxu0 0
  %293 = vmatpush.bf16.xpose.msra.mxu0 0
  %294 = vmatpush.bf16.xpose.msra.mxu0 0
  %295 = vmatpush.bf16.xpose.msra.mxu0 0
  %296 = vmatpush.bf16.xpose.msra.mxu0 0
  %297 = vmatpush.bf16.xpose.msra.mxu0 0
  %298 = vmatpush.bf16.xpose.msra.mxu0 0
  %299 = vmatpush.bf16.xpose.msra.mxu0 %v109
  %300 = vmatmul.bf16.gmra.mxu0 %v290
  %v301 = vpop.f32.mrf.mxu0
  %v302 = vadd.f32 %v281, %v301
  %v303 = vpop.f32.mrf.mxu0
  %v304 = vadd.f32 %v285, %v303
  %305 = vdwg.mxu0
  %v306 = vperm.slane %v27, 6
  %v307 = vadd.f32 %v302, %v306
  %v308 = vadd.f32 %v304, %v306
  %309 = vset.pattern.permute.xlu0 7
  %310 = vperm.xlu0 %309, %v25
  %v311 = vpop.permute.xlu0 %310
  %313 = vset.pattern.permute.xlu0 7
  %314 = vperm.xlu0 %313, %v26
  %v315 = vpop.permute.xlu0 %314
  %317 = vrot.lane.b32.xlu0 %v219, 32
  %v318 = vpop.permute.xlu0 %317
  %v320 = vsel %vm57, %v318, 0
  %322 = vmatpush.bf16.xpose.msra.mxu0 0
  %323 = vmatpush.bf16.xpose.msra.mxu0 0
  %324 = vmatpush.bf16.xpose.msra.mxu0 0
  %325 = vmatpush.bf16.xpose.msra.mxu0 0
  %326 = vmatpush.bf16.xpose.msra.mxu0 0
  %327 = vmatpush.bf16.xpose.msra.mxu0 0
  %328 = vmatpush.bf16.xpose.msra.mxu0 0
  %329 = vmatpush.bf16.xpose.msra.mxu0 %v109
  %330 = vmatmul.bf16.gmra.mxu0 %v320
  %v331 = vpop.f32.mrf.mxu0
  %v332 = vadd.f32 %v311, %v331
  %v333 = vpop.f32.mrf.mxu0
  %v334 = vadd.f32 %v315, %v333
  %335 = vdwg.mxu0
  %v336 = vperm.slane %v27, 7
  %v337 = vadd.f32 %v332, %v336
  %v338 = vadd.f32 %v334, %v336
  %341 = vrot.lane.b32.xlu0 %v157, 16
  %v342 = vpop.permute.xlu0 %341
  %343 = vrot.lane.b32.xlu0 %v158, 16
  %v344 = vpop.permute.xlu0 %343
  %349 = vrot.lane.b32.xlu0 %v187, 32
  %v350 = vpop.permute.xlu0 %349
  %351 = vrot.lane.b32.xlu0 %v188, 32
  %v352 = vpop.permute.xlu0 %351
  %357 = vrot.lane.b32.xlu0 %v217, 48
  %v358 = vpop.permute.xlu0 %357
  %359 = vrot.lane.b32.xlu0 %v218, 48
  %v360 = vpop.permute.xlu0 %359
  %365 = vrot.lane.b32.xlu0 %v246, 64
  %v366 = vpop.permute.xlu0 %365
  %367 = vrot.lane.b32.xlu0 %v247, 64
  %v368 = vpop.permute.xlu0 %367
  %373 = vrot.lane.b32.xlu0 %v277, 80
  %v374 = vpop.permute.xlu0 %373
  %375 = vrot.lane.b32.xlu0 %v278, 80
  %v376 = vpop.permute.xlu0 %375
  %381 = vrot.lane.b32.xlu0 %v307, 96
  %v382 = vpop.permute.xlu0 %381
  %383 = vrot.lane.b32.xlu0 %v308, 96
  %v384 = vpop.permute.xlu0 %383
  %389 = vrot.lane.b32.xlu0 %v337, 112
  %v390 = vpop.permute.xlu0 %389
  %391 = vrot.lane.b32.xlu0 %v338, 112
  %v392 = vpop.permute.xlu0 %391
  %vm395 = vcmask 130048
  %v396 = vsel %vm395, %v126, %v342
  %v397 = vsel %vm395, %v127, %v344
  %v398 = vsel %vm57, %v396, %v350
  %v399 = vsel %vm57, %v397, %v352
  %vm400 = vcmask 392192
  %v401 = vsel %vm400, %v398, %v358
  %v402 = vsel %vm400, %v399, %v360
  %vm403 = vcmask 523264
  %v404 = vsel %vm403, %v401, %v366
  %v405 = vsel %vm403, %v402, %v368
  %vm406 = vcmask 654336
  %v407 = vsel %vm406, %v404, %v374
  %v408 = vsel %vm406, %v405, %v376
  %vm409 = vcmask 785408
  %v410 = vsel %vm409, %v407, %v382
  %v411 = vsel %vm409, %v408, %v384
  %vm412 = vcmask 916480
  %v413 = vsel %vm412, %v410, %v390
  %v414 = vsel %vm412, %v411, %v392
  %415 = vst [vmem:[%s5] sm:$0xff] %v413
  %416 = vst [vmem:[%s5 + $0x8] sm:$0xff] %v414
  // Predicated region
  $region22: #{biaffine_dependency.3} parent=0 // pred_check
    _
  $region23: #{biaffine_dependency.3} parent=0 // pred_check_branch
    %418 = sbr.rel (0) target = $region25
  $region24: #{biaffine_dependency.3} parent=0 // pred_region
    _
  $region25: #{biaffine_dependency.3} parent=0 // pred_fallthru
    _
  // Predicated region
  $region26: #{biaffine_dependency.3} parent=0 // pred_check
    _
  $region27: #{biaffine_dependency.3} parent=0 // pred_check_branch
    %420 = sbr.rel (0) target = $region29
  $region28: #{biaffine_dependency.3} parent=0 // pred_region
    _
  $region29: #{biaffine_dependency.3} parent=0 // pred_fallthru
    _

</llo_original>
